<compile_context>
chip_gen: v6e
topology: v6e:2x2x1
jax: 0.10.0
libtpu: 0.0.40
codegen_flags: <defaults>
</compile_context>

<pallas_src>
import functools

import jax
import jax.numpy as jnp
from jax import lax
from jax.experimental import pallas as pl
from jax.experimental.pallas import tpu as pltpu


def _softplus(x):
    # Overflow-safe softplus; identical formula in kernel and reference.
    return jnp.maximum(x, 0.0) + jnp.log(1.0 + jnp.exp(-jnp.abs(x)))


# --------------------------------- kernel ----------------------------------


def bys_kernel(x_ref, pack_ref, out_ref, *, N, C):
    # pack: (3, C, C+1) = [mu | rho | eps], bias folded in as column C.
    pack = pack_ref[...]
    wb = pack[0] + _softplus(pack[1]) * pack[2]     # (C, C+1) reparam, once
    w = wb[:, :C]                                   # (C, C)  1x1-conv weights
    b = wb[:, C:]                                   # (C, 1)  bias column

    # 1x1 conv / channel mix, fully unrolled (N and C are tiny and static):
    #   out[n, co, p] = b[co] + sum_ci w[co, ci] * x[n, ci, p]
    for n in range(N):                              # N = 2
        xn = x_ref[n]                               # (C, HW), lane-dense
        acc = w[:, 0:1] * xn[0:1, :]                # init from first MAC
        for ci in range(1, C):                      # C = 4
            acc = acc + w[:, ci:ci + 1] * xn[ci:ci + 1, :]
        out_ref[n] = acc + b                        # bias added once, on store


# -------------------------------- wrapper -----------------------------------


def bys_forward(x, params):
    N, C, H, W = x.shape
    HW = H * W

    x3 = x.reshape(N, C, HW).astype(jnp.float32)

    f32 = lambda a: a.astype(jnp.float32)
    wmu = f32(params["weight_mu"][:, :, 0, 0])        # (C, C)
    wrho = f32(params["weight_rho"][:, :, 0, 0])      # (C, C)
    weps = f32(params["weight_epsilon"][:, :, 0, 0])  # (C, C)
    bmu = f32(params["bias_mu"]).reshape(C, 1)        # (C, 1)
    brho = f32(params["bias_rho"]).reshape(C, 1)      # (C, 1)
    beps = f32(params["bias_epsilon"]).reshape(C, 1)  # (C, 1)

    # One packed parameter slab: [:, :, :C] weight terms, [:, :, C] bias terms.
    pack = jnp.stack(
        [jnp.concatenate([wmu, bmu], axis=1),
         jnp.concatenate([wrho, brho], axis=1),
         jnp.concatenate([weps, beps], axis=1)],
        axis=0)                                       # (3, C, C+1)

    kernel = functools.partial(bys_kernel, N=N, C=C)
    out = pl.pallas_call(
        kernel,
        out_shape=jax.ShapeDtypeStruct((N, C, HW), jnp.float32),
        # No grid: full-array blocks, single invocation, everything in VMEM.
        in_specs=[pl.BlockSpec(memory_space=pltpu.MemorySpace.VMEM),
                  pl.BlockSpec(memory_space=pltpu.MemorySpace.VMEM)],
        out_specs=pl.BlockSpec(memory_space=pltpu.MemorySpace.VMEM),
    )(x3, pack)
    return out.reshape(N, C, H, W)


# --------------------------- pure-JAX reference -----------------------------


def bys_reference(x, params):
    w = params["weight_mu"] + _softplus(params["weight_rho"]) * params["weight_epsilon"]
    b = params["bias_mu"] + _softplus(params["bias_rho"]) * params["bias_epsilon"]
    out = lax.conv_general_dilated(
        x, w, window_strides=(1, 1), padding=[(0, 0), (0, 0)],
        dimension_numbers=("NCHW", "OIHW", "NCHW"),
        precision=lax.Precision.HIGHEST,
    )
    return out + b[None, :, None, None]


# ----------------------------------- main ------------------------------------


if __name__ == "__main__":
    N, C, H, W = 2, 4, 16, 16

    root = jax.random.PRNGKey(0)
    ks = jax.random.split(root, 8)
    f32 = jnp.float32

    params = {
        # shapes from BYS.__init__(in_plane1=C)
        "weight_mu": jax.random.uniform(ks[0], (C, C, 1, 1), f32, -0.2, 0.2),
        "weight_rho": jax.random.uniform(ks[1], (C, C, 1, 1), f32, -5.0, -4.0),
        "bias_mu": jax.random.uniform(ks[2], (C,), f32, -0.2, 0.2),
        "bias_rho": jax.random.uniform(ks[3], (C,), f32, -5.0, -4.0),
        "weight_epsilon": jax.random.laplace(ks[4], (C, C, 1, 1), f32),
        "bias_epsilon": jax.random.laplace(ks[5], (C,), f32),
    }
    x = jax.random.normal(ks[6], (N, C, H, W), dtype=f32)

    out = jax.jit(bys_forward)(x, params)
    jax.block_until_ready(out)

    ref = bys_reference(x, params)
    assert out.shape == (N, C, H, W)
    err = float(jnp.max(jnp.abs(out - ref)))
    assert jnp.allclose(out, ref, rtol=1e-4, atol=1e-4), (
        "BYS mismatch, max err %e" % err)

    print("KERNEL_OK")
</pallas_src>

<mosaic_0001>
module attributes {stable_mosaic.version = 11 : i64} {
  func.func @bys_kernel(%arg0: memref<2x4x256xf32, #tpu.memory_space<vmem>>, %arg1: memref<3x4x5xf32, #tpu.memory_space<vmem>>, %arg2: memref<2x4x256xf32, #tpu.memory_space<vmem>>) attributes {dimension_semantics = [], scalar_prefetch = 0 : i64, scratch_operands = 0 : i64, tpu.core_type = #tpu.core_type<tc>} {
    %c0 = arith.constant 0 : index
    %c0_0 = arith.constant 0 : index
    %c0_1 = arith.constant 0 : index
    %0 = vector.load %arg1[%c0, %c0_0, %c0_1] : memref<3x4x5xf32, #tpu.memory_space<vmem>>, vector<3x4x5xf32>
    %1 = vector.extract_strided_slice %0 {offsets = [0, 0, 0], sizes = [1, 4, 5], strides = [1, 1, 1]} : vector<3x4x5xf32> to vector<1x4x5xf32>
    %2 = vector.shape_cast %1 : vector<1x4x5xf32> to vector<4x5xf32>
    %3 = vector.extract_strided_slice %0 {offsets = [1, 0, 0], sizes = [1, 4, 5], strides = [1, 1, 1]} : vector<3x4x5xf32> to vector<1x4x5xf32>
    %4 = vector.shape_cast %3 : vector<1x4x5xf32> to vector<4x5xf32>
    %cst = arith.constant 0.000000e+00 : f32
    %5 = vector.broadcast %cst : f32 to vector<4x5xf32>
    %6 = arith.maximumf %4, %5 : vector<4x5xf32>
    %7 = math.absf %4 : vector<4x5xf32>
    %cst_2 = arith.constant 0.000000e+00 : f32
    %8 = vector.broadcast %cst_2 : f32 to vector<4x5xf32>
    %9 = arith.subf %8, %7 : vector<4x5xf32>
    %10 = math.exp %9 : vector<4x5xf32>
    %cst_3 = arith.constant 1.000000e+00 : f32
    %11 = vector.broadcast %cst_3 : f32 to vector<4x5xf32>
    %12 = arith.addf %11, %10 : vector<4x5xf32>
    %13 = math.log %12 : vector<4x5xf32>
    %14 = arith.addf %6, %13 : vector<4x5xf32>
    %15 = vector.extract_strided_slice %0 {offsets = [2, 0, 0], sizes = [1, 4, 5], strides = [1, 1, 1]} : vector<3x4x5xf32> to vector<1x4x5xf32>
    %16 = vector.shape_cast %15 : vector<1x4x5xf32> to vector<4x5xf32>
    %17 = arith.mulf %14, %16 : vector<4x5xf32>
    %18 = arith.addf %2, %17 : vector<4x5xf32>
    %19 = vector.extract_strided_slice %18 {offsets = [0, 0], sizes = [4, 4], strides = [1, 1]} : vector<4x5xf32> to vector<4x4xf32>
    %20 = vector.extract_strided_slice %18 {offsets = [0, 4], sizes = [4, 1], strides = [1, 1]} : vector<4x5xf32> to vector<4x1xf32>
    %c0_4 = arith.constant 0 : index
    %c0_5 = arith.constant 0 : index
    %c0_6 = arith.constant 0 : index
    %21 = vector.load %arg0[%c0_4, %c0_5, %c0_6] : memref<2x4x256xf32, #tpu.memory_space<vmem>>, vector<1x4x256xf32>
    %22 = vector.shape_cast %21 : vector<1x4x256xf32> to vector<4x256xf32>
    %23 = vector.extract_strided_slice %19 {offsets = [0, 0], sizes = [4, 1], strides = [1, 1]} : vector<4x4xf32> to vector<4x1xf32>
    %24 = vector.extract_strided_slice %22 {offsets = [0, 0], sizes = [1, 256], strides = [1, 1]} : vector<4x256xf32> to vector<1x256xf32>
    %25 = vector.broadcast %23 : vector<4x1xf32> to vector<4x256xf32>
    %26 = vector.broadcast %24 : vector<1x256xf32> to vector<4x256xf32>
    %27 = arith.mulf %25, %26 : vector<4x256xf32>
    %28 = vector.extract_strided_slice %19 {offsets = [0, 1], sizes = [4, 1], strides = [1, 1]} : vector<4x4xf32> to vector<4x1xf32>
    %29 = vector.extract_strided_slice %22 {offsets = [1, 0], sizes = [1, 256], strides = [1, 1]} : vector<4x256xf32> to vector<1x256xf32>
    %30 = vector.broadcast %28 : vector<4x1xf32> to vector<4x256xf32>
    %31 = vector.broadcast %29 : vector<1x256xf32> to vector<4x256xf32>
    %32 = arith.mulf %30, %31 : vector<4x256xf32>
    %33 = arith.addf %27, %32 : vector<4x256xf32>
    %34 = vector.extract_strided_slice %19 {offsets = [0, 2], sizes = [4, 1], strides = [1, 1]} : vector<4x4xf32> to vector<4x1xf32>
    %35 = vector.extract_strided_slice %22 {offsets = [2, 0], sizes = [1, 256], strides = [1, 1]} : vector<4x256xf32> to vector<1x256xf32>
    %36 = vector.broadcast %34 : vector<4x1xf32> to vector<4x256xf32>
    %37 = vector.broadcast %35 : vector<1x256xf32> to vector<4x256xf32>
    %38 = arith.mulf %36, %37 : vector<4x256xf32>
    %39 = arith.addf %33, %38 : vector<4x256xf32>
    %40 = vector.extract_strided_slice %19 {offsets = [0, 3], sizes = [4, 1], strides = [1, 1]} : vector<4x4xf32> to vector<4x1xf32>
    %41 = vector.extract_strided_slice %22 {offsets = [3, 0], sizes = [1, 256], strides = [1, 1]} : vector<4x256xf32> to vector<1x256xf32>
    %42 = vector.broadcast %40 : vector<4x1xf32> to vector<4x256xf32>
    %43 = vector.broadcast %41 : vector<1x256xf32> to vector<4x256xf32>
    %44 = arith.mulf %42, %43 : vector<4x256xf32>
    %45 = arith.addf %39, %44 : vector<4x256xf32>
    %46 = vector.broadcast %20 : vector<4x1xf32> to vector<4x256xf32>
    %47 = arith.addf %45, %46 : vector<4x256xf32>
    %c0_7 = arith.constant 0 : index
    %c0_8 = arith.constant 0 : index
    %c0_9 = arith.constant 0 : index
    %48 = vector.load %arg2[%c0_7, %c0_8, %c0_9] : memref<2x4x256xf32, #tpu.memory_space<vmem>>, vector<1x4x256xf32>
    %49 = vector.shape_cast %48 : vector<1x4x256xf32> to vector<4x256xf32>
    %50 = vector.shape_cast %47 : vector<4x256xf32> to vector<1x4x256xf32>
    tpu.vector_store %arg2[%c0_7, %c0_8, %c0_9], %50 {strides = array<i32>} : memref<2x4x256xf32, #tpu.memory_space<vmem>>, vector<1x4x256xf32>,
    %c1 = arith.constant 1 : index
    %c0_10 = arith.constant 0 : index
    %c0_11 = arith.constant 0 : index
    %51 = vector.load %arg0[%c1, %c0_10, %c0_11] : memref<2x4x256xf32, #tpu.memory_space<vmem>>, vector<1x4x256xf32>
    %52 = vector.shape_cast %51 : vector<1x4x256xf32> to vector<4x256xf32>
    %53 = vector.extract_strided_slice %19 {offsets = [0, 0], sizes = [4, 1], strides = [1, 1]} : vector<4x4xf32> to vector<4x1xf32>
    %54 = vector.extract_strided_slice %52 {offsets = [0, 0], sizes = [1, 256], strides = [1, 1]} : vector<4x256xf32> to vector<1x256xf32>
    %55 = vector.broadcast %53 : vector<4x1xf32> to vector<4x256xf32>
    %56 = vector.broadcast %54 : vector<1x256xf32> to vector<4x256xf32>
    %57 = arith.mulf %55, %56 : vector<4x256xf32>
    %58 = vector.extract_strided_slice %19 {offsets = [0, 1], sizes = [4, 1], strides = [1, 1]} : vector<4x4xf32> to vector<4x1xf32>
    %59 = vector.extract_strided_slice %52 {offsets = [1, 0], sizes = [1, 256], strides = [1, 1]} : vector<4x256xf32> to vector<1x256xf32>
    %60 = vector.broadcast %58 : vector<4x1xf32> to vector<4x256xf32>
    %61 = vector.broadcast %59 : vector<1x256xf32> to vector<4x256xf32>
    %62 = arith.mulf %60, %61 : vector<4x256xf32>
    %63 = arith.addf %57, %62 : vector<4x256xf32>
    %64 = vector.extract_strided_slice %19 {offsets = [0, 2], sizes = [4, 1], strides = [1, 1]} : vector<4x4xf32> to vector<4x1xf32>
    %65 = vector.extract_strided_slice %52 {offsets = [2, 0], sizes = [1, 256], strides = [1, 1]} : vector<4x256xf32> to vector<1x256xf32>
    %66 = vector.broadcast %64 : vector<4x1xf32> to vector<4x256xf32>
    %67 = vector.broadcast %65 : vector<1x256xf32> to vector<4x256xf32>
    %68 = arith.mulf %66, %67 : vector<4x256xf32>
    %69 = arith.addf %63, %68 : vector<4x256xf32>
    %70 = vector.extract_strided_slice %19 {offsets = [0, 3], sizes = [4, 1], strides = [1, 1]} : vector<4x4xf32> to vector<4x1xf32>
    %71 = vector.extract_strided_slice %52 {offsets = [3, 0], sizes = [1, 256], strides = [1, 1]} : vector<4x256xf32> to vector<1x256xf32>
    %72 = vector.broadcast %70 : vector<4x1xf32> to vector<4x256xf32>
    %73 = vector.broadcast %71 : vector<1x256xf32> to vector<4x256xf32>
    %74 = arith.mulf %72, %73 : vector<4x256xf32>
    %75 = arith.addf %69, %74 : vector<4x256xf32>
    %76 = vector.broadcast %20 : vector<4x1xf32> to vector<4x256xf32>
    %77 = arith.addf %75, %76 : vector<4x256xf32>
    %c1_12 = arith.constant 1 : index
    %c0_13 = arith.constant 0 : index
    %c0_14 = arith.constant 0 : index
    %78 = vector.load %arg2[%c1_12, %c0_13, %c0_14] : memref<2x4x256xf32, #tpu.memory_space<vmem>>, vector<1x4x256xf32>
    %79 = vector.shape_cast %78 : vector<1x4x256xf32> to vector<4x256xf32>
    %80 = vector.shape_cast %77 : vector<4x256xf32> to vector<1x4x256xf32>
    tpu.vector_store %arg2[%c1_12, %c0_13, %c0_14], %80 {strides = array<i32>} : memref<2x4x256xf32, #tpu.memory_space<vmem>>, vector<1x4x256xf32>,
    return
  }
}

</mosaic_0001>

<llo_original>
// kernel: bys_forward.1
$region0: #{bys_forward.1}
  #allocation0 [shape = 'u32[]', space=smem, size = 0x4, offset = 0x4, fixed_abs, tag = 'smem constant byte address 0x4 - core index']
  #allocation1 [shape = 'u32[144,128]{1,0:T(1,128)}', space=vmem, size = 0x12000, scoped, tag = 'internal scratch']
  %s0 = inlined_call_operand.vmem [shape: f32[2,4,256], index: 0, kind: input, shape index: {}]
  %s1 = inlined_call_operand.vmem [shape: f32[3,4,5], index: 1, kind: input, shape index: {}]
  %s2 = inlined_call_operand.vmem [shape: f32[2,4,256], index: 2, kind: output, shape index: {}]
  %s3 = sld [smem:[#allocation0]]
  $region18: #{bys_forward.1} parent=0
    _
  %s5 = ssub.s32 1, %s3
  %s6 = scalar_select 0, %s5, %s3
  // Predicated region
  $region2: #{bys_forward.1} parent=0 // pred_check
    _
  $region3: #{bys_forward.1} parent=0 // pred_check_branch
    %8 = sbr.rel (0) target = $region5
  $region4: #{bys_forward.1} parent=0 // pred_region
    _
  $region5: #{bys_forward.1} parent=0 // pred_fallthru
    _
  // Predicated region
  $region6: #{bys_forward.1} parent=0 // pred_check
    _
  $region7: #{bys_forward.1} parent=0 // pred_check_branch
    %10 = sbr.rel (0) target = $region9
  $region8: #{bys_forward.1} parent=0 // pred_region
    _
  $region9: #{bys_forward.1} parent=0 // pred_fallthru
    _
  %v11 = vld [vmem:[%s1] sm:$0xf]
  %v12 = vld [vmem:[%s1 + $0x4] sm:$0xf]
  %v13 = vld [vmem:[%s1 + $0x8] sm:$0xf]
  %v14 = vmax.f32 %v12, 0.0
  %v15 = vand.u32 2147483647, %v12
  %v16 = vsub.f32 0.0, %v15
  %v17 = vmul.f32 %v16, 1.442695
  %v18 = vpow.pop %v17
  %v19 = vadd.f32 %v18, 1.0
  %v20 = vlog2.pop %v19
  %v21 = vmul.f32 %v20, 0.6931472
  %v22 = vadd.f32 %v14, %v21
  %v23 = vmul.f32 %v22, %v13
  %v24 = vadd.f32 %v11, %v23
  %v25 = vld [vmem:[%s0] sm:$0xff]
  %27 = vset.pattern.permute.xlu0 0
  %28 = vperm.xlu0 %27, %v24
  %v29 = vpop.permute.xlu0 %28
  %v32 = vlaneseq
  %v33 = vshrl.u32 %v32, 7
  %v34 = vsub.s32 0, %v33
  %v35 = vrot.slane %v25, %v34
  %v36 = vlaneseq
  %v37 = vshrl.u32 %v36, 7
  %v38 = vsub.s32 4, %v37
  %v39 = vrot.slane %v25, %v38
  %v42 = vlaneseq
  %v43 = vshrl.u32 %v42, 7
  %v44 = vsub.s32 0, %v43
  %v45 = vrot.slane %v35, %v44
  %v46 = vlaneseq
  %v47 = vshrl.u32 %v46, 7
  %v48 = vsub.s32 0, %v47
  %v49 = vrot.slane %v39, %v48
  %v50 = vmul.f32 %v29, %v45
  %v51 = vmul.f32 %v29, %v49
  %52 = vset.pattern.permute.xlu0 1
  %53 = vperm.xlu0 %52, %v24
  %v54 = vpop.permute.xlu0 %53
  %v56 = vlaneseq
  %v57 = vshrl.u32 %v56, 7
  %v58 = vsub.s32 1, %v57
  %v59 = vrot.slane %v25, %v58
  %v60 = vlaneseq
  %v61 = vshrl.u32 %v60, 7
  %v62 = vsub.s32 5, %v61
  %v63 = vrot.slane %v25, %v62
  %v66 = vlaneseq
  %v67 = vshrl.u32 %v66, 7
  %v68 = vsub.s32 1, %v67
  %v69 = vrot.slane %v59, %v68
  %v70 = vlaneseq
  %v71 = vshrl.u32 %v70, 7
  %v72 = vsub.s32 1, %v71
  %v73 = vrot.slane %v63, %v72
  %v74 = vmul.f32 %v54, %v69
  %v75 = vmul.f32 %v54, %v73
  %v76 = vadd.f32 %v50, %v74
  %v77 = vadd.f32 %v51, %v75
  %78 = vset.pattern.permute.xlu0 2
  %79 = vperm.xlu0 %78, %v24
  %v80 = vpop.permute.xlu0 %79
  %v82 = vlaneseq
  %v83 = vshrl.u32 %v82, 7
  %v84 = vsub.s32 2, %v83
  %v85 = vrot.slane %v25, %v84
  %v86 = vlaneseq
  %v87 = vshrl.u32 %v86, 7
  %v88 = vsub.s32 6, %v87
  %v89 = vrot.slane %v25, %v88
  %v92 = vlaneseq
  %v93 = vshrl.u32 %v92, 7
  %v94 = vsub.s32 2, %v93
  %v95 = vrot.slane %v85, %v94
  %v96 = vlaneseq
  %v97 = vshrl.u32 %v96, 7
  %v98 = vsub.s32 2, %v97
  %v99 = vrot.slane %v89, %v98
  %v100 = vmul.f32 %v80, %v95
  %v101 = vmul.f32 %v80, %v99
  %v102 = vadd.f32 %v76, %v100
  %v103 = vadd.f32 %v77, %v101
  %104 = vset.pattern.permute.xlu0 3
  %105 = vperm.xlu0 %104, %v24
  %v106 = vpop.permute.xlu0 %105
  %v108 = vlaneseq
  %v109 = vshrl.u32 %v108, 7
  %v110 = vsub.s32 3, %v109
  %v111 = vrot.slane %v25, %v110
  %v112 = vlaneseq
  %v113 = vshrl.u32 %v112, 7
  %v114 = vsub.s32 7, %v113
  %v115 = vrot.slane %v25, %v114
  %v118 = vlaneseq
  %v119 = vshrl.u32 %v118, 7
  %v120 = vsub.s32 3, %v119
  %v121 = vrot.slane %v111, %v120
  %v122 = vlaneseq
  %v123 = vshrl.u32 %v122, 7
  %v124 = vsub.s32 3, %v123
  %v125 = vrot.slane %v115, %v124
  %v126 = vmul.f32 %v106, %v121
  %v127 = vmul.f32 %v106, %v125
  %v128 = vadd.f32 %v102, %v126
  %v129 = vadd.f32 %v103, %v127
  %130 = vset.pattern.permute.xlu0 4
  %131 = vperm.xlu0 %130, %v24
  %v132 = vpop.permute.xlu0 %131
  %v134 = vadd.f32 %v128, %v132
  %v135 = vadd.f32 %v129, %v132
  %v138 = vcombine.low %v134, %v135
  %140 = vst [vmem:[%s2] sm:$0xff] %v138
  %s141 = scalar_lea.vmem %s0, 8
  %v142 = vld [vmem:[%s141] sm:$0xff]
  %v144 = vlaneseq
  %v145 = vshrl.u32 %v144, 7
  %v146 = vsub.s32 0, %v145
  %v147 = vrot.slane %v142, %v146
  %v148 = vlaneseq
  %v149 = vshrl.u32 %v148, 7
  %v150 = vsub.s32 4, %v149
  %v151 = vrot.slane %v142, %v150
  %v154 = vlaneseq
  %v155 = vshrl.u32 %v154, 7
  %v156 = vsub.s32 0, %v155
  %v157 = vrot.slane %v147, %v156
  %v158 = vlaneseq
  %v159 = vshrl.u32 %v158, 7
  %v160 = vsub.s32 0, %v159
  %v161 = vrot.slane %v151, %v160
  %v162 = vmul.f32 %v29, %v157
  %v163 = vmul.f32 %v29, %v161
  %v164 = vlaneseq
  %v165 = vshrl.u32 %v164, 7
  %v166 = vsub.s32 1, %v165
  %v167 = vrot.slane %v142, %v166
  %v168 = vlaneseq
  %v169 = vshrl.u32 %v168, 7
  %v170 = vsub.s32 5, %v169
  %v171 = vrot.slane %v142, %v170
  %v174 = vlaneseq
  %v175 = vshrl.u32 %v174, 7
  %v176 = vsub.s32 1, %v175
  %v177 = vrot.slane %v167, %v176
  %v178 = vlaneseq
  %v179 = vshrl.u32 %v178, 7
  %v180 = vsub.s32 1, %v179
  %v181 = vrot.slane %v171, %v180
  %v182 = vmul.f32 %v54, %v177
  %v183 = vmul.f32 %v54, %v181
  %v184 = vadd.f32 %v162, %v182
  %v185 = vadd.f32 %v163, %v183
  %v186 = vlaneseq
  %v187 = vshrl.u32 %v186, 7
  %v188 = vsub.s32 2, %v187
  %v189 = vrot.slane %v142, %v188
  %v190 = vlaneseq
  %v191 = vshrl.u32 %v190, 7
  %v192 = vsub.s32 6, %v191
  %v193 = vrot.slane %v142, %v192
  %v196 = vlaneseq
  %v197 = vshrl.u32 %v196, 7
  %v198 = vsub.s32 2, %v197
  %v199 = vrot.slane %v189, %v198
  %v200 = vlaneseq
  %v201 = vshrl.u32 %v200, 7
  %v202 = vsub.s32 2, %v201
  %v203 = vrot.slane %v193, %v202
  %v204 = vmul.f32 %v80, %v199
  %v205 = vmul.f32 %v80, %v203
  %v206 = vadd.f32 %v184, %v204
  %v207 = vadd.f32 %v185, %v205
  %v208 = vlaneseq
  %v209 = vshrl.u32 %v208, 7
  %v210 = vsub.s32 3, %v209
  %v211 = vrot.slane %v142, %v210
  %v212 = vlaneseq
  %v213 = vshrl.u32 %v212, 7
  %v214 = vsub.s32 7, %v213
  %v215 = vrot.slane %v142, %v214
  %v218 = vlaneseq
  %v219 = vshrl.u32 %v218, 7
  %v220 = vsub.s32 3, %v219
  %v221 = vrot.slane %v211, %v220
  %v222 = vlaneseq
  %v223 = vshrl.u32 %v222, 7
  %v224 = vsub.s32 3, %v223
  %v225 = vrot.slane %v215, %v224
  %v226 = vmul.f32 %v106, %v221
  %v227 = vmul.f32 %v106, %v225
  %v228 = vadd.f32 %v206, %v226
  %v229 = vadd.f32 %v207, %v227
  %v230 = vadd.f32 %v228, %v132
  %v231 = vadd.f32 %v229, %v132
  %v234 = vcombine.low %v230, %v231
  %s236 = scalar_lea.vmem %s2, 8
  %237 = vst [vmem:[%s236] sm:$0xff] %v234
  // Predicated region
  $region10: #{bys_forward.1} parent=0 // pred_check
    _
  $region11: #{bys_forward.1} parent=0 // pred_check_branch
    %239 = sbr.rel (0) target = $region13
  $region12: #{bys_forward.1} parent=0 // pred_region
    _
  $region13: #{bys_forward.1} parent=0 // pred_fallthru
    _
  // Predicated region
  $region14: #{bys_forward.1} parent=0 // pred_check
    _
  $region15: #{bys_forward.1} parent=0 // pred_check_branch
    %241 = sbr.rel (0) target = $region17
  $region16: #{bys_forward.1} parent=0 // pred_region
    _
  $region17: #{bys_forward.1} parent=0 // pred_fallthru
    _

</llo_original>
